<compile_context>
chip_gen: v7x
topology: tpu7x:2x2x1
jax: 0.10.0
libtpu: 0.0.40
codegen_flags: <defaults>
</compile_context>

<pallas_src>
import functools

import jax
import jax.numpy as jnp
from jax.experimental import pallas as pl
from jax.experimental.pallas import tpu as pltpu


# ----------------------------------------------------------------------------
# Fused STSGCM kernel.  Everything resident in VMEM:
#   adj   : (3N, 3N) f32        (optionally masked in-kernel)
#   h     : (3N, B*C) f32       activations, lane-dense (B*C == 128 here)
#   wcat_l: (B*C_{l-1}, 2*B*C_l) bf16  == [kron(I_B, W_lin) | kron(I_B, W_gate)]
#   bcat_l: (1, 2*B*C_l) f32    == [tiled b_lin | tiled b_gate]
#   out   : (N, B*Cout) f32
# Per layer: agg = adj @ h ; y = agg @ wcat + bcat ; h = y_lin * sigmoid(y_gate)
# Running max over layers of rows [N, 2N) accumulates in VMEM/registers.
# Last layer only computes rows [N, 2N).
# ----------------------------------------------------------------------------
def _stsgcm_fused_kernel(*refs, num_layers, num_vertices, has_mask):
    o_ref = refs[-1]
    adj_ref = refs[0]
    if has_mask:
        mask_ref, x_ref = refs[1], refs[2]
        layer_refs = refs[3:-1]
    else:
        x_ref = refs[1]
        layer_refs = refs[2:-1]
    n = num_vertices

    adj = adj_ref[...]
    if has_mask:
        adj = adj * mask_ref[...]              # fused mask (VPU; no HBM round trip)
    adj_bf = adj.astype(jnp.bfloat16)          # bf16 MXU operand, f32 accumulate

    h = x_ref[...]                             # (3N, B*Cin) f32
    acc = None
    for l in range(num_layers):                # static Python unroll over layers
        wcat = layer_refs[2 * l + 0][...]      # (B*C_{l-1}, 2*B*C_l) bf16
        bcat = layer_refs[2 * l + 1][...]      # (1, 2*B*C_l) f32
        bc = wcat.shape[1] // 2                # B*C_l (static)
        last = (l == num_layers - 1)

        # Last layer: only rows [N, 2N) feed the output -> compute just those.
        # n = 16 is sublane-aligned (multiple of 8; bf16 tile boundary at 16).
        a_l = adj_bf[n:2 * n, :] if last else adj_bf

        agg = jnp.dot(a_l, h.astype(jnp.bfloat16),
                      preferred_element_type=jnp.float32)
        # Single 256-lane matmul for lin+gate, then free whole-vreg split.
        y = jnp.dot(agg.astype(jnp.bfloat16), wcat,
                    preferred_element_type=jnp.float32) + bcat
        lin, gate = y[:, :bc], y[:, bc:]
        # sigmoid = 1 / (1 + exp(-x)) via EUP exp + EUP approx reciprocal.
        sig = pl.reciprocal(1.0 + jnp.exp(-gate), approx=True)
        g = lin * sig                          # GLU (f32 epilogue)

        mid = g if last else g[n:2 * n, :]     # sublane-aligned static slice
        acc = mid if acc is None else jnp.maximum(acc, mid)
        if not last:
            h = g

    o_ref[...] = acc


# ----------------------------------------------------------------------------
# One-time parameter preparation (off the hot path).
#   params: list of (w, b, out_dim) with w: (in_dim, 2*out_dim) (torch W^T),
#           b: (2*out_dim,)
#   returns list of (wcat_bf16, bcat_f32) per layer:
#       wcat = [kron(I_B, W_lin) | kron(I_B, W_gate)]  (B*Cin, 2*B*Cout), bf16
#       bcat = [tile(b_lin, B)   | tile(b_gate, B)  ]  (1, 2*B*Cout),     f32
# ----------------------------------------------------------------------------
def prepare_params(params, batch):
    out_dims = [od for (_, _, od) in params]
    # Running max over layers (torch.cat in the reference) requires equal dims.
    assert len(set(out_dims)) == 1, "STSGCM requires all out_dims equal"
    eye_b = jnp.eye(batch, dtype=jnp.float32)
    prepped = []
    for (w, b, out_dim) in params:
        w_lin, w_gate = w[:, :out_dim], w[:, out_dim:]
        wl_k = jnp.kron(eye_b, w_lin)          # (B*Cin, B*Cout)
        wg_k = jnp.kron(eye_b, w_gate)         # (B*Cin, B*Cout)
        wcat = jnp.concatenate([wl_k, wg_k], axis=1).astype(jnp.bfloat16)
        bl = jnp.tile(b[:out_dim], batch)      # (B*Cout,)
        bg = jnp.tile(b[out_dim:], batch)      # (B*Cout,)
        bcat = jnp.concatenate([bl, bg]).reshape(1, 2 * batch * out_dim)
        prepped.append((wcat, bcat.astype(jnp.float32)))
    return prepped


# ----------------------------------------------------------------------------
# STSGCM forward (PyTorch I/O convention, GLU activation)
#   adj:  (3N, 3N) f32
#   x:    (3N, B, Cin) f32
#   prepared_params: output of prepare_params
#   mask: optional (3N, 3N) f32  (fused into the kernel)
#   returns (N, B, Cout) f32
# ----------------------------------------------------------------------------
# TODO(synk): only the GLU activation branch of gcn_operation is implemented
#             (the module default); the 'relu' branch is omitted.
@functools.partial(jax.jit, static_argnames=("num_of_vertices",))
def stsgcm_forward(adj, x, prepared_params, num_of_vertices, mask=None):
    threeN, batch, cin = x.shape
    num_layers = len(prepared_params)
    cout = prepared_params[-1][0].shape[1] // (2 * batch)   # static
    has_mask = mask is not None

    x_flat = x.reshape(threeN, batch * cin)                 # free row-major reshape
    flat_args = [arr for layer in prepared_params for arr in layer]
    inputs = [adj] + ([mask] if has_mask else []) + [x_flat] + flat_args

    kernel = functools.partial(
        _stsgcm_fused_kernel,
        num_layers=num_layers,
        num_vertices=num_of_vertices,
        has_mask=has_mask,
    )
    out_flat = pl.pallas_call(
        kernel,
        out_shape=jax.ShapeDtypeStruct((num_of_vertices, batch * cout), jnp.float32),
        in_specs=[pl.BlockSpec(memory_space=pltpu.MemorySpace.VMEM)] * len(inputs),
        out_specs=pl.BlockSpec(memory_space=pltpu.MemorySpace.VMEM),
    )(*inputs)

    return out_flat.reshape(num_of_vertices, batch, cout)   # free reshape


# ----------------------------------------------------------------------------
# Pure-JAX reference (mirrors the PyTorch code exactly, f32 HIGHEST precision)
# ----------------------------------------------------------------------------
def stsgcm_reference(adj, x, params, num_of_vertices, mask=None):
    a = adj if mask is None else adj * mask
    n = num_of_vertices
    need_concat = []
    h = x
    for (w, b, out_dim) in params:
        h = jnp.einsum('nm,mbc->nbc', a, h,
                       precision=jax.lax.Precision.HIGHEST)
        y = jnp.einsum('nbc,cd->nbd', h, w,
                       precision=jax.lax.Precision.HIGHEST) + b
        lhs, rhs = y[..., :out_dim], y[..., out_dim:]
        h = lhs * jax.nn.sigmoid(rhs)
        need_concat.append(h[n:2 * n])
    return jnp.max(jnp.stack(need_concat, axis=0), axis=0)


# ----------------------------------------------------------------------------
# Deterministic parameter construction (synthetic, no checkpoint load)
# ----------------------------------------------------------------------------
def init_params(key, in_dim, out_dims):
    params = []
    prev = in_dim
    for out_dim in out_dims:
        key, kw, kb = jax.random.split(key, 3)
        bound = 1.0 / jnp.sqrt(prev)
        # torch Linear weight is (2*out, in); we store its transpose (in, 2*out)
        w = jax.random.uniform(kw, (prev, 2 * out_dim), jnp.float32,
                               minval=-bound, maxval=bound)
        b = jax.random.uniform(kb, (2 * out_dim,), jnp.float32,
                               minval=-bound, maxval=bound)
        params.append((w, b, out_dim))
        prev = out_dim
    return params


if __name__ == "__main__":
    key = jax.random.PRNGKey(0)

    N = 16               # num_of_vertices
    B = 4                # batch            -> B*C = 128 (lane-dense)
    Cin = 32             # in_dim
    out_dims = [32, 32, 32]
    threeN = 3 * N

    k_adj, k_x, k_p, k_m = jax.random.split(key, 4)
    adj = jax.random.uniform(k_adj, (threeN, threeN), jnp.float32) / threeN
    x = jax.random.normal(k_x, (threeN, B, Cin), jnp.float32)
    mask = (jax.random.uniform(k_m, (threeN, threeN), jnp.float32) > 0.3
            ).astype(jnp.float32)
    params = init_params(k_p, Cin, out_dims)

    prepared = prepare_params(params, B)       # one-time, off hot path

    # Tolerance: kernel uses bf16 MXU operands with f32 accumulation; expected
    # absolute error vs. the f32 HIGHEST-precision reference is ~1e-3 here.
    RTOL = ATOL = 1e-2

    # --- no-mask path ---
    out = stsgcm_forward(adj, x, prepared, num_of_vertices=N)
    out = jax.block_until_ready(out)
    ref = stsgcm_reference(adj, x, params, N)
    assert out.shape == (N, B, out_dims[-1]), out.shape
    assert jnp.allclose(out, ref, rtol=RTOL, atol=ATOL), (
        float(jnp.max(jnp.abs(out - ref))))

    # --- fused-mask path ---
    out_m = stsgcm_forward(adj, x, prepared, num_of_vertices=N, mask=mask)
    out_m = jax.block_until_ready(out_m)
    ref_m = stsgcm_reference(adj, x, params, N, mask=mask)
    assert jnp.allclose(out_m, ref_m, rtol=RTOL, atol=ATOL), (
        float(jnp.max(jnp.abs(out_m - ref_m))))

    print("KERNEL_OK")
</pallas_src>

<mosaic_0001>
module attributes {stable_mosaic.version = 11 : i64} {
  func.func @_stsgcm_fused_kernel(%arg0: memref<48x48xf32, #tpu.memory_space<vmem>>, %arg1: memref<48x128xf32, #tpu.memory_space<vmem>>, %arg2: memref<128x256xbf16, #tpu.memory_space<vmem>>, %arg3: memref<1x256xf32, #tpu.memory_space<vmem>>, %arg4: memref<128x256xbf16, #tpu.memory_space<vmem>>, %arg5: memref<1x256xf32, #tpu.memory_space<vmem>>, %arg6: memref<128x256xbf16, #tpu.memory_space<vmem>>, %arg7: memref<1x256xf32, #tpu.memory_space<vmem>>, %arg8: memref<16x128xf32, #tpu.memory_space<vmem>>) attributes {dimension_semantics = [], scalar_prefetch = 0 : i64, scratch_operands = 0 : i64, tpu.core_type = #tpu.core_type<tc>} {
    %c0 = arith.constant 0 : index
    %c0_0 = arith.constant 0 : index
    %0 = vector.load %arg0[%c0, %c0_0] : memref<48x48xf32, #tpu.memory_space<vmem>>, vector<48x48xf32>
    %1 = arith.truncf %0 : vector<48x48xf32> to vector<48x48xbf16>
    %c0_1 = arith.constant 0 : index
    %c0_2 = arith.constant 0 : index
    %2 = vector.load %arg1[%c0_1, %c0_2] : memref<48x128xf32, #tpu.memory_space<vmem>>, vector<48x128xf32>
    %c0_3 = arith.constant 0 : index
    %c0_4 = arith.constant 0 : index
    %3 = vector.load %arg2[%c0_3, %c0_4] : memref<128x256xbf16, #tpu.memory_space<vmem>>, vector<128x256xbf16>
    %c0_5 = arith.constant 0 : index
    %c0_6 = arith.constant 0 : index
    %4 = vector.load %arg3[%c0_5, %c0_6] : memref<1x256xf32, #tpu.memory_space<vmem>>, vector<1x256xf32>
    %5 = arith.truncf %2 : vector<48x128xf32> to vector<48x128xbf16>
    %cst = arith.constant dense<0.000000e+00> : vector<48x128xf32>
    %6 = tpu.matmul %1, %5, %cst {dimension_numbers = #tpu.dot_dimension_numbers<[1], [0], [0], [1], [0, 0, 1, 1], [], []>} : vector<48x48xbf16>, vector<48x128xbf16>, vector<48x128xf32> -> vector<48x128xf32>
    %7 = arith.truncf %6 : vector<48x128xf32> to vector<48x128xbf16>
    %cst_7 = arith.constant dense<0.000000e+00> : vector<48x256xf32>
    %8 = tpu.matmul %7, %3, %cst_7 {dimension_numbers = #tpu.dot_dimension_numbers<[1], [0], [0], [1], [0, 0, 1, 1], [], []>} : vector<48x128xbf16>, vector<128x256xbf16>, vector<48x256xf32> -> vector<48x256xf32>
    %9 = vector.broadcast %4 : vector<1x256xf32> to vector<48x256xf32>
    %10 = arith.addf %8, %9 : vector<48x256xf32>
    %11 = vector.extract_strided_slice %10 {offsets = [0, 0], sizes = [48, 128], strides = [1, 1]} : vector<48x256xf32> to vector<48x128xf32>
    %12 = vector.extract_strided_slice %10 {offsets = [0, 128], sizes = [48, 128], strides = [1, 1]} : vector<48x256xf32> to vector<48x128xf32>
    %cst_8 = arith.constant 0.000000e+00 : f32
    %13 = vector.broadcast %cst_8 : f32 to vector<48x128xf32>
    %14 = arith.subf %13, %12 : vector<48x128xf32>
    %15 = math.exp %14 : vector<48x128xf32>
    %cst_9 = arith.constant 1.000000e+00 : f32
    %16 = vector.broadcast %cst_9 : f32 to vector<48x128xf32>
    %17 = arith.addf %16, %15 : vector<48x128xf32>
    %18 = tpu.reciprocal %17 {approx = true} : vector<48x128xf32> -> vector<48x128xf32>
    %19 = arith.mulf %11, %18 : vector<48x128xf32>
    %20 = vector.extract_strided_slice %19 {offsets = [16, 0], sizes = [16, 128], strides = [1, 1]} : vector<48x128xf32> to vector<16x128xf32>
    %c0_10 = arith.constant 0 : index
    %c0_11 = arith.constant 0 : index
    %21 = vector.load %arg4[%c0_10, %c0_11] : memref<128x256xbf16, #tpu.memory_space<vmem>>, vector<128x256xbf16>
    %c0_12 = arith.constant 0 : index
    %c0_13 = arith.constant 0 : index
    %22 = vector.load %arg5[%c0_12, %c0_13] : memref<1x256xf32, #tpu.memory_space<vmem>>, vector<1x256xf32>
    %23 = arith.truncf %19 : vector<48x128xf32> to vector<48x128xbf16>
    %cst_14 = arith.constant dense<0.000000e+00> : vector<48x128xf32>
    %24 = tpu.matmul %1, %23, %cst_14 {dimension_numbers = #tpu.dot_dimension_numbers<[1], [0], [0], [1], [0, 0, 1, 1], [], []>} : vector<48x48xbf16>, vector<48x128xbf16>, vector<48x128xf32> -> vector<48x128xf32>
    %25 = arith.truncf %24 : vector<48x128xf32> to vector<48x128xbf16>
    %cst_15 = arith.constant dense<0.000000e+00> : vector<48x256xf32>
    %26 = tpu.matmul %25, %21, %cst_15 {dimension_numbers = #tpu.dot_dimension_numbers<[1], [0], [0], [1], [0, 0, 1, 1], [], []>} : vector<48x128xbf16>, vector<128x256xbf16>, vector<48x256xf32> -> vector<48x256xf32>
    %27 = vector.broadcast %22 : vector<1x256xf32> to vector<48x256xf32>
    %28 = arith.addf %26, %27 : vector<48x256xf32>
    %29 = vector.extract_strided_slice %28 {offsets = [0, 0], sizes = [48, 128], strides = [1, 1]} : vector<48x256xf32> to vector<48x128xf32>
    %30 = vector.extract_strided_slice %28 {offsets = [0, 128], sizes = [48, 128], strides = [1, 1]} : vector<48x256xf32> to vector<48x128xf32>
    %cst_16 = arith.constant 0.000000e+00 : f32
    %31 = vector.broadcast %cst_16 : f32 to vector<48x128xf32>
    %32 = arith.subf %31, %30 : vector<48x128xf32>
    %33 = math.exp %32 : vector<48x128xf32>
    %cst_17 = arith.constant 1.000000e+00 : f32
    %34 = vector.broadcast %cst_17 : f32 to vector<48x128xf32>
    %35 = arith.addf %34, %33 : vector<48x128xf32>
    %36 = tpu.reciprocal %35 {approx = true} : vector<48x128xf32> -> vector<48x128xf32>
    %37 = arith.mulf %29, %36 : vector<48x128xf32>
    %38 = vector.extract_strided_slice %37 {offsets = [16, 0], sizes = [16, 128], strides = [1, 1]} : vector<48x128xf32> to vector<16x128xf32>
    %39 = arith.maximumf %20, %38 : vector<16x128xf32>
    %c0_18 = arith.constant 0 : index
    %c0_19 = arith.constant 0 : index
    %40 = vector.load %arg6[%c0_18, %c0_19] : memref<128x256xbf16, #tpu.memory_space<vmem>>, vector<128x256xbf16>
    %c0_20 = arith.constant 0 : index
    %c0_21 = arith.constant 0 : index
    %41 = vector.load %arg7[%c0_20, %c0_21] : memref<1x256xf32, #tpu.memory_space<vmem>>, vector<1x256xf32>
    %42 = vector.extract_strided_slice %1 {offsets = [16, 0], sizes = [16, 48], strides = [1, 1]} : vector<48x48xbf16> to vector<16x48xbf16>
    %43 = arith.truncf %37 : vector<48x128xf32> to vector<48x128xbf16>
    %cst_22 = arith.constant dense<0.000000e+00> : vector<16x128xf32>
    %44 = tpu.matmul %42, %43, %cst_22 {dimension_numbers = #tpu.dot_dimension_numbers<[1], [0], [0], [1], [0, 0, 1, 1], [], []>} : vector<16x48xbf16>, vector<48x128xbf16>, vector<16x128xf32> -> vector<16x128xf32>
    %45 = arith.truncf %44 : vector<16x128xf32> to vector<16x128xbf16>
    %cst_23 = arith.constant dense<0.000000e+00> : vector<16x256xf32>
    %46 = tpu.matmul %45, %40, %cst_23 {dimension_numbers = #tpu.dot_dimension_numbers<[1], [0], [0], [1], [0, 0, 1, 1], [], []>} : vector<16x128xbf16>, vector<128x256xbf16>, vector<16x256xf32> -> vector<16x256xf32>
    %47 = vector.broadcast %41 : vector<1x256xf32> to vector<16x256xf32>
    %48 = arith.addf %46, %47 : vector<16x256xf32>
    %49 = vector.extract_strided_slice %48 {offsets = [0, 0], sizes = [16, 128], strides = [1, 1]} : vector<16x256xf32> to vector<16x128xf32>
    %50 = vector.extract_strided_slice %48 {offsets = [0, 128], sizes = [16, 128], strides = [1, 1]} : vector<16x256xf32> to vector<16x128xf32>
    %cst_24 = arith.constant 0.000000e+00 : f32
    %51 = vector.broadcast %cst_24 : f32 to vector<16x128xf32>
    %52 = arith.subf %51, %50 : vector<16x128xf32>
    %53 = math.exp %52 : vector<16x128xf32>
    %cst_25 = arith.constant 1.000000e+00 : f32
    %54 = vector.broadcast %cst_25 : f32 to vector<16x128xf32>
    %55 = arith.addf %54, %53 : vector<16x128xf32>
    %56 = tpu.reciprocal %55 {approx = true} : vector<16x128xf32> -> vector<16x128xf32>
    %57 = arith.mulf %49, %56 : vector<16x128xf32>
    %58 = arith.maximumf %39, %57 : vector<16x128xf32>
    %c0_26 = arith.constant 0 : index
    %c0_27 = arith.constant 0 : index
    %59 = vector.load %arg8[%c0_26, %c0_27] : memref<16x128xf32, #tpu.memory_space<vmem>>, vector<16x128xf32>
    tpu.vector_store %arg8[%c0_26, %c0_27], %58 {strides = array<i32>} : memref<16x128xf32, #tpu.memory_space<vmem>>, vector<16x128xf32>,
    return
  }
}

</mosaic_0001>

<llo_original>
// kernel: stsgcm_forward.1
$region0: #{stsgcm_forward.1}
  #allocation0 [shape = 'u32[]', space=smem, size = 0x4, offset = 0x4, fixed_abs, tag = 'smem constant byte address 0x4 - core index']
  #allocation1 [shape = 'u32[144,128]{1,0:T(1,128)}', space=vmem, size = 0x12000, scoped, tag = 'internal scratch']
  %s0 = inlined_call_operand.vmem [shape: f32[48,48], index: 0, kind: input, shape index: {}]
  %s1 = inlined_call_operand.vmem [shape: f32[48,128], index: 1, kind: input, shape index: {}]
  %s2 = inlined_call_operand.vmem [shape: bf16[128,256], index: 2, kind: input, shape index: {}]
  %s3 = inlined_call_operand.vmem [shape: f32[1,256], index: 3, kind: input, shape index: {}]
  %s4 = inlined_call_operand.hbm [shape: bf16[128,256], index: 4, kind: input, shape index: {}]
  %s5 = inlined_call_operand.vmem [shape: f32[1,256], index: 5, kind: input, shape index: {}]
  %s6 = inlined_call_operand.hbm [shape: bf16[128,256], index: 6, kind: input, shape index: {}]
  %s7 = inlined_call_operand.vmem [shape: f32[1,256], index: 7, kind: input, shape index: {}]
  %s8 = inlined_call_operand.vmem [shape: f32[16,128], index: 8, kind: output, shape index: {}]
  %s9 = sld [smem:[#allocation0]]
  $region50: #{stsgcm_forward.1} parent=0
    _
  %s11 = ssub.s32 1, %s9
  %s12 = scalar_select 0, %s11, %s9
  $region1: #{stsgcm_forward.1} parent=0
    #allocation2 [shape = 'u8[65536]{0}', space=vmem, size = 0x10000, scoped, tag = 'input window, operand 4, single buffered']
    #allocation3 [shape = 's32[1]{0}', space=sflag, size = 0x4, scoped, tag = 'scoped memory for stsgcm_forward.1']
    #allocation4 [shape = 'u8[65536]{0}', space=vmem, size = 0x10000, scoped, tag = 'input window, operand 6, single buffered']
    #allocation5 [shape = 's32[1]{0}', space=sflag, size = 0x4, scoped, tag = 'scoped memory for stsgcm_forward.1']
    %13 = vsyncpa [#allocation3], 0
    %14 = vsyncpa [#allocation5], 0
    // Predicated region
    $region2: #{stsgcm_forward.1} parent=1 // pred_check
      _
    $region3: #{stsgcm_forward.1} parent=1 // pred_check_branch
      %16 = sbr.rel (0) target = $region5
    $region4: #{stsgcm_forward.1} parent=1 // pred_region
      _
    $region5: #{stsgcm_forward.1} parent=1 // pred_fallthru
      _
    // Predicated region
    $region6: #{stsgcm_forward.1} parent=1 // pred_check
      _
    $region7: #{stsgcm_forward.1} parent=1 // pred_check_branch
      %18 = sbr.rel (0) target = $region9
    $region8: #{stsgcm_forward.1} parent=1 // pred_region
      _
    $region9: #{stsgcm_forward.1} parent=1 // pred_fallthru
      _
    // Predicated region
    $region10: #{stsgcm_forward.1} parent=1 // pred_check
      _
    $region11: #{stsgcm_forward.1} parent=1 // pred_check_branch
      %20 = sbr.rel (0) target = $region13
    $region12: #{stsgcm_forward.1} parent=1 // pred_region
      _
    $region13: #{stsgcm_forward.1} parent=1 // pred_fallthru
      _
    // Predicated region
    $region14: #{stsgcm_forward.1} parent=1 // pred_check
      _
    $region15: #{stsgcm_forward.1} parent=1 // pred_check_branch
      %22 = sbr.rel (0) target = $region17
    $region16: #{stsgcm_forward.1} parent=1 // pred_region
      _
    $region17: #{stsgcm_forward.1} parent=1 // pred_fallthru
      _
    // Predicated region
    $region18: #{stsgcm_forward.1} parent=1 // pred_check
      _
    $region19: #{stsgcm_forward.1} parent=1 // pred_check_branch
      %24 = sbr.rel (0) target = $region21
    $region20: #{stsgcm_forward.1} parent=1 // pred_region
      %s26 = ssub.s32 2048, 2048
      %27 = vsyncadd [#allocation3], %s26
      %s28 = sshll.u32 [#allocation2], 4
      %s29 = int_to_ptr.vmem [resolvable:$true] %s28
      %34 = dma.hbm_to_vmem [thread:$0]  %s4, 2048, %s29, [#allocation3], 128, 128, 8
    $region21: #{stsgcm_forward.1} parent=1 // pred_fallthru
      _
    // Predicated region
    $region22: #{stsgcm_forward.1} parent=1 // pred_check
      _
    $region23: #{stsgcm_forward.1} parent=1 // pred_check_branch
      %36 = sbr.rel (0) target = $region25
    $region24: #{stsgcm_forward.1} parent=1 // pred_region
      _
    $region25: #{stsgcm_forward.1} parent=1 // pred_fallthru
      _
    // Predicated region
    $region26: #{stsgcm_forward.1} parent=1 // pred_check
      _
    $region27: #{stsgcm_forward.1} parent=1 // pred_check_branch
      %38 = sbr.rel (0) target = $region29
    $region28: #{stsgcm_forward.1} parent=1 // pred_region
      %s40 = ssub.s32 2048, 2048
      %41 = vsyncadd [#allocation5], %s40
      %s42 = sshll.u32 [#allocation4], 4
      %s43 = int_to_ptr.vmem [resolvable:$true] %s42
      %48 = dma.hbm_to_vmem [thread:$0]  %s6, 2048, %s43, [#allocation5], 128, 128, 8
    $region29: #{stsgcm_forward.1} parent=1 // pred_fallthru
      _
    // Predicated region
    $region30: #{stsgcm_forward.1} parent=1 // pred_check
      _
    $region31: #{stsgcm_forward.1} parent=1 // pred_check_branch
      %50 = sbr.rel (0) target = $region33
    $region32: #{stsgcm_forward.1} parent=1 // pred_region
      _
    $region33: #{stsgcm_forward.1} parent=1 // pred_fallthru
      _
    // Predicated region
    $region34: #{stsgcm_forward.1} parent=1 // pred_check
      _
    $region35: #{stsgcm_forward.1} parent=1 // pred_check_branch
      %52 = sbr.rel (0) target = $region37
    $region36: #{stsgcm_forward.1} parent=1 // pred_region
      %53 = dma.done [#allocation3], 2048
    $region37: #{stsgcm_forward.1} parent=1 // pred_fallthru
      _
    // Predicated region
    $region38: #{stsgcm_forward.1} parent=1 // pred_check
      _
    $region39: #{stsgcm_forward.1} parent=1 // pred_check_branch
      %55 = sbr.rel (0) target = $region41
    $region40: #{stsgcm_forward.1} parent=1 // pred_region
      %56 = dma.done [#allocation5], 2048
    $region41: #{stsgcm_forward.1} parent=1 // pred_fallthru
      _
    %v58 = vld [vmem:[%s0] sm:$0xff]
    %v59 = vld [vmem:[%s0 + $0x8] sm:$0xff]
    %v60 = vld [vmem:[%s0 + $0x10] sm:$0xff]
    %v61 = vld [vmem:[%s0 + $0x18] sm:$0xff]
    %v62 = vld [vmem:[%s0 + $0x20] sm:$0xff]
    %v63 = vld [vmem:[%s0 + $0x28] sm:$0xff]
    %v64 = vpack.c.bf16 %v59, %v58
    %v65 = vpack.c.bf16 %v61, %v60
    %v66 = vpack.c.bf16 %v63, %v62
    %v67 = vld [vmem:[%s1] sm:$0xff]
    %v68 = vld [vmem:[%s1 + $0x8] sm:$0xff]
    %v69 = vld [vmem:[%s1 + $0x10] sm:$0xff]
    %v70 = vld [vmem:[%s1 + $0x18] sm:$0xff]
    %v71 = vld [vmem:[%s1 + $0x20] sm:$0xff]
    %v72 = vld [vmem:[%s1 + $0x28] sm:$0xff]
    %v73 = vld [vmem:[%s2] sm:$0xff]
    %v74 = vld [vmem:[%s2 + $0x8] sm:$0xff]
    %v75 = vld [vmem:[%s2 + $0x10] sm:$0xff]
    %v76 = vld [vmem:[%s2 + $0x18] sm:$0xff]
    %v77 = vld [vmem:[%s2 + $0x20] sm:$0xff]
    %v78 = vld [vmem:[%s2 + $0x28] sm:$0xff]
    %v79 = vld [vmem:[%s2 + $0x30] sm:$0xff]
    %v80 = vld [vmem:[%s2 + $0x38] sm:$0xff]
    %v81 = vld [vmem:[%s2 + $0x40] sm:$0xff]
    %v82 = vld [vmem:[%s2 + $0x48] sm:$0xff]
    %v83 = vld [vmem:[%s2 + $0x50] sm:$0xff]
    %v84 = vld [vmem:[%s2 + $0x58] sm:$0xff]
    %v85 = vld [vmem:[%s2 + $0x60] sm:$0xff]
    %v86 = vld [vmem:[%s2 + $0x68] sm:$0xff]
    %v87 = vld [vmem:[%s2 + $0x70] sm:$0xff]
    %v88 = vld [vmem:[%s2 + $0x78] sm:$0xff]
    %v89 = vld [vmem:[%s3] sm:$0x3]
    %v90 = vpack.c.bf16 %v68, %v67
    %v91 = vpack.c.bf16 %v70, %v69
    %v92 = vpack.c.bf16 %v72, %v71
    %vm93 = vcmask 392192
    %v95 = vsel %vm93, %v64, 0
    %v98 = vsel %vm93, %v65, 0
    %v101 = vsel %vm93, %v66, 0
    %103 = vmatprep.subr.bf16.mxu0 0
    %104 = vmatpush1.bf16.msra.mxu0 %v90
    %105 = vmatprep.subr.bf16.mxu0 0
    %106 = vmatpush1.bf16.msra.mxu0 %v91
    %107 = vmatprep.subr.bf16.mxu0 0
    %108 = vmatpush1.bf16.msra.mxu0 %v92
    %109 = vmatprep.subr.bf16.mxu0 0
    %110 = vmatpush1.bf16.msra.mxu0 0
    %111 = vmatprep.subr.bf16.mxu0 0
    %112 = vmatpush1.bf16.msra.mxu0 0
    %113 = vmatprep.subr.bf16.mxu0 0
    %114 = vmatpush1.bf16.msra.mxu0 0
    %115 = vmatprep.subr.bf16.mxu0 0
    %116 = vmatpush1.bf16.msra.mxu0 0
    %117 = vmatprep.subr.bf16.mxu0 0
    %118 = vmatpush1.bf16.msra.mxu0 0
    %119 = vmatprep.subr.bf16.mxu0 0
    %120 = vmatpush1.bf16.msra.mxu0 0
    %121 = vmatprep.subr.bf16.mxu0 0
    %122 = vmatpush1.bf16.msra.mxu0 0
    %123 = vmatprep.subr.bf16.mxu0 0
    %124 = vmatpush1.bf16.msra.mxu0 0
    %125 = vmatprep.subr.bf16.mxu0 0
    %126 = vmatpush1.bf16.msra.mxu0 0
    %127 = vmatprep.subr.bf16.mxu0 0
    %128 = vmatpush1.bf16.msra.mxu0 0
    %129 = vmatprep.subr.bf16.mxu0 0
    %130 = vmatpush1.bf16.msra.mxu0 0
    %131 = vmatprep.subr.bf16.mxu0 0
    %132 = vmatpush1.bf16.msra.mxu0 0
    %133 = vmatprep.subr.bf16.mxu0 0
    %134 = vmatpush1.bf16.msra.mxu0 0
    %135 = vmatprep.mubr.bf16.mxu0 0
    %136 = vmatmul.mubr.bf16.gmra.mrb[0].mxu0 %v95
    %v137 = vpop.f32.mrb[0].mxu0
    %v138 = vadd.f32 0.0, %v137
    %v139 = vpop.f32.mrb[0].mxu0
    %v140 = vpop.f32.mrb[0].mxu0
    %v141 = vadd.f32 0.0, %v140
    %v142 = vpop.f32.mrb[0].mxu0
    %143 = vmatprep.mubr.bf16.mxu0 0
    %144 = vmatmul.mubr.bf16.gmra.mrb[0].mxu0 %v98
    %v145 = vpop.f32.mrb[0].mxu0
    %v146 = vadd.f32 0.0, %v145
    %v147 = vpop.f32.mrb[0].mxu0
    %v148 = vpop.f32.mrb[0].mxu0
    %v149 = vadd.f32 0.0, %v148
    %v150 = vpop.f32.mrb[0].mxu0
    %151 = vmatprep.mubr.bf16.mxu0 0
    %152 = vmatmul.mubr.bf16.gmra.mrb[0].mxu0 %v101
    %v153 = vpop.f32.mrb[0].mxu0
    %v154 = vadd.f32 0.0, %v153
    %v155 = vpop.f32.mrb[0].mxu0
    %v156 = vpop.f32.mrb[0].mxu0
    %v157 = vadd.f32 0.0, %v156
    %v158 = vpop.f32.mrb[0].mxu0
    %159 = vdwg.mxu0
    %v160 = vpack.c.bf16 %v141, %v138
    %v161 = vpack.c.bf16 %v149, %v146
    %v162 = vpack.c.bf16 %v157, %v154
    %v164 = vlaneseq
    %v165 = vshrl.u32 %v164, 7
    %v166 = vsub.s32 0, %v165
    %v167 = vrot.slane %v89, %v166
    %v168 = vlaneseq
    %v169 = vshrl.u32 %v168, 7
    %v170 = vsub.s32 1, %v169
    %v171 = vrot.slane %v89, %v170
    %v190 = vunpack.c.l.b16 %v73
    %v191 = vunpack.c.h.b16 %v73
    %v192 = vunpack.c.l.b16 %v74
    %v193 = vunpack.c.h.b16 %v74
    %v194 = vunpack.c.l.b16 %v75
    %v195 = vunpack.c.h.b16 %v75
    %v196 = vunpack.c.l.b16 %v76
    %v197 = vunpack.c.h.b16 %v76
    %v198 = vunpack.c.l.b16 %v77
    %v199 = vunpack.c.h.b16 %v77
    %v200 = vunpack.c.l.b16 %v78
    %v201 = vunpack.c.h.b16 %v78
    %v202 = vunpack.c.l.b16 %v79
    %v203 = vunpack.c.h.b16 %v79
    %v204 = vunpack.c.l.b16 %v80
    %v205 = vunpack.c.h.b16 %v80
    %v206 = vunpack.c.l.b16 %v81
    %v207 = vunpack.c.h.b16 %v81
    %v208 = vunpack.c.l.b16 %v82
    %v209 = vunpack.c.h.b16 %v82
    %v210 = vunpack.c.l.b16 %v83
    %v211 = vunpack.c.h.b16 %v83
    %v212 = vunpack.c.l.b16 %v84
    %v213 = vunpack.c.h.b16 %v84
    %v214 = vunpack.c.l.b16 %v85
    %v215 = vunpack.c.h.b16 %v85
    %v216 = vunpack.c.l.b16 %v86
    %v217 = vunpack.c.h.b16 %v86
    %v218 = vunpack.c.l.b16 %v87
    %v219 = vunpack.c.h.b16 %v87
    %v220 = vunpack.c.l.b16 %v88
    %v221 = vunpack.c.h.b16 %v88
    %v222 = vpack.c.b16 %v192, %v190
    %v223 = vpack.c.b16 %v193, %v191
    %v224 = vpack.c.b16 %v196, %v194
    %v225 = vpack.c.b16 %v197, %v195
    %v226 = vpack.c.b16 %v200, %v198
    %v227 = vpack.c.b16 %v201, %v199
    %v228 = vpack.c.b16 %v204, %v202
    %v229 = vpack.c.b16 %v205, %v203
    %v230 = vpack.c.b16 %v208, %v206
    %v231 = vpack.c.b16 %v209, %v207
    %v232 = vpack.c.b16 %v212, %v210
    %v233 = vpack.c.b16 %v213, %v211
    %v234 = vpack.c.b16 %v216, %v214
    %v235 = vpack.c.b16 %v217, %v215
    %v236 = vpack.c.b16 %v220, %v218
    %v237 = vpack.c.b16 %v221, %v219
    %254 = vmatprep.subr.bf16.mxu0 %v223
    %255 = vmatpush1.bf16.msra.mxu0 %v222
    %256 = vmatprep.subr.bf16.mxu0 %v225
    %257 = vmatpush1.bf16.msra.mxu0 %v224
    %258 = vmatprep.subr.bf16.mxu0 %v227
    %259 = vmatpush1.bf16.msra.mxu0 %v226
    %260 = vmatprep.subr.bf16.mxu0 %v229
    %261 = vmatpush1.bf16.msra.mxu0 %v228
    %262 = vmatprep.subr.bf16.mxu0 %v231
    %263 = vmatpush1.bf16.msra.mxu0 %v230
    %264 = vmatprep.subr.bf16.mxu0 %v233
    %265 = vmatpush1.bf16.msra.mxu0 %v232
    %266 = vmatprep.subr.bf16.mxu0 %v235
    %267 = vmatpush1.bf16.msra.mxu0 %v234
    %268 = vmatprep.subr.bf16.mxu0 %v237
    %269 = vmatpush1.bf16.msra.mxu0 %v236
    %270 = vmatprep.subr.bf16.mxu0 0
    %271 = vmatpush1.bf16.msra.mxu0 0
    %272 = vmatprep.subr.bf16.mxu0 0
    %273 = vmatpush1.bf16.msra.mxu0 0
    %274 = vmatprep.subr.bf16.mxu0 0
    %275 = vmatpush1.bf16.msra.mxu0 0
    %276 = vmatprep.subr.bf16.mxu0 0
    %277 = vmatpush1.bf16.msra.mxu0 0
    %278 = vmatprep.subr.bf16.mxu0 0
    %279 = vmatpush1.bf16.msra.mxu0 0
    %280 = vmatprep.subr.bf16.mxu0 0
    %281 = vmatpush1.bf16.msra.mxu0 0
    %282 = vmatprep.subr.bf16.mxu0 0
    %283 = vmatpush1.bf16.msra.mxu0 0
    %284 = vmatprep.subr.bf16.mxu0 0
    %285 = vmatpush1.bf16.msra.mxu0 0
    %286 = vmatprep.mubr.bf16.mxu0 0
    %287 = vmatmul.mubr.bf16.gmra.mrb[0].mxu0 %v160
    %v288 = vpop.f32.mrb[0].mxu0
    %v289 = vadd.f32 %v167, %v288
    %v290 = vpop.f32.mrb[0].mxu0
    %v291 = vadd.f32 %v171, %v290
    %v292 = vpop.f32.mrb[0].mxu0
    %v293 = vadd.f32 %v167, %v292
    %v294 = vpop.f32.mrb[0].mxu0
    %v295 = vadd.f32 %v171, %v294
    %296 = vmatprep.mubr.bf16.mxu0 0
    %297 = vmatmul.mubr.bf16.gmra.mrb[0].mxu0 %v161
    %v298 = vpop.f32.mrb[0].mxu0
    %v299 = vadd.f32 %v167, %v298
    %v300 = vpop.f32.mrb[0].mxu0
    %v301 = vadd.f32 %v171, %v300
    %v302 = vpop.f32.mrb[0].mxu0
    %v303 = vadd.f32 %v167, %v302
    %v304 = vpop.f32.mrb[0].mxu0
    %v305 = vadd.f32 %v171, %v304
    %306 = vmatprep.mubr.bf16.mxu0 0
    %307 = vmatmul.mubr.bf16.gmra.mrb[0].mxu0 %v162
    %v308 = vpop.f32.mrb[0].mxu0
    %v309 = vadd.f32 %v167, %v308
    %v310 = vpop.f32.mrb[0].mxu0
    %v311 = vadd.f32 %v171, %v310
    %v312 = vpop.f32.mrb[0].mxu0
    %v313 = vadd.f32 %v167, %v312
    %v314 = vpop.f32.mrb[0].mxu0
    %v315 = vadd.f32 %v171, %v314
    %316 = vdwg.mxu0
    %v317 = vsub.f32 0.0, %v291
    %v318 = vsub.f32 0.0, %v295
    %v319 = vsub.f32 0.0, %v301
    %v320 = vsub.f32 0.0, %v305
    %v321 = vsub.f32 0.0, %v311
    %v322 = vsub.f32 0.0, %v315
    %v323 = vmul.f32 %v317, 1.442695
    %v324 = vpow.pop %v323
    %v325 = vmul.f32 %v318, 1.442695
    %v326 = vpow.pop %v325
    %v327 = vmul.f32 %v319, 1.442695
    %v328 = vpow.pop %v327
    %v329 = vmul.f32 %v320, 1.442695
    %v330 = vpow.pop %v329
    %v331 = vmul.f32 %v321, 1.442695
    %v332 = vpow.pop %v331
    %v333 = vmul.f32 %v322, 1.442695
    %v334 = vpow.pop %v333
    %v335 = vadd.f32 %v324, 1.0
    %v336 = vadd.f32 %v326, 1.0
    %v337 = vadd.f32 %v328, 1.0
    %v338 = vadd.f32 %v330, 1.0
    %v339 = vadd.f32 %v332, 1.0
    %v340 = vadd.f32 %v334, 1.0
    %v341 = vrcp.pop %v335
    %v342 = vrcp.pop %v336
    %v343 = vrcp.pop %v337
    %v344 = vrcp.pop %v338
    %v345 = vrcp.pop %v339
    %v346 = vrcp.pop %v340
    %v347 = vmul.f32 %v289, %v341
    %v348 = vmul.f32 %v293, %v342
    %v349 = vmul.f32 %v299, %v343
    %v350 = vmul.f32 %v303, %v344
    %v351 = vmul.f32 %v309, %v345
    %v352 = vmul.f32 %v313, %v346
    %v353 = vld [vmem:[#allocation2] sm:$0xff]
    %v354 = vld [vmem:[#allocation2 + $0x8] sm:$0xff]
    %v355 = vld [vmem:[#allocation2 + $0x10] sm:$0xff]
    %v356 = vld [vmem:[#allocation2 + $0x18] sm:$0xff]
    %v357 = vld [vmem:[#allocation2 + $0x20] sm:$0xff]
    %v358 = vld [vmem:[#allocation2 + $0x28] sm:$0xff]
    %v359 = vld [vmem:[#allocation2 + $0x30] sm:$0xff]
    %v360 = vld [vmem:[#allocation2 + $0x38] sm:$0xff]
    %v361 = vld [vmem:[#allocation2 + $0x40] sm:$0xff]
    %v362 = vld [vmem:[#allocation2 + $0x48] sm:$0xff]
    %v363 = vld [vmem:[#allocation2 + $0x50] sm:$0xff]
    %v364 = vld [vmem:[#allocation2 + $0x58] sm:$0xff]
    %v365 = vld [vmem:[#allocation2 + $0x60] sm:$0xff]
    %v366 = vld [vmem:[#allocation2 + $0x68] sm:$0xff]
    %v367 = vld [vmem:[#allocation2 + $0x70] sm:$0xff]
    %v368 = vld [vmem:[#allocation2 + $0x78] sm:$0xff]
    %v369 = vld [vmem:[%s5] sm:$0x3]
    %v370 = vpack.c.bf16 %v348, %v347
    %v371 = vpack.c.bf16 %v350, %v349
    %v372 = vpack.c.bf16 %v352, %v351
    %373 = vmatprep.subr.bf16.mxu0 0
    %374 = vmatpush1.bf16.msra.mxu0 %v370
    %375 = vmatprep.subr.bf16.mxu0 0
    %376 = vmatpush1.bf16.msra.mxu0 %v371
    %377 = vmatprep.subr.bf16.mxu0 0
    %378 = vmatpush1.bf16.msra.mxu0 %v372
    %379 = vmatprep.subr.bf16.mxu0 0
    %380 = vmatpush1.bf16.msra.mxu0 0
    %381 = vmatprep.subr.bf16.mxu0 0
    %382 = vmatpush1.bf16.msra.mxu0 0
    %383 = vmatprep.subr.bf16.mxu0 0
    %384 = vmatpush1.bf16.msra.mxu0 0
    %385 = vmatprep.subr.bf16.mxu0 0
    %386 = vmatpush1.bf16.msra.mxu0 0
    %387 = vmatprep.subr.bf16.mxu0 0
    %388 = vmatpush1.bf16.msra.mxu0 0
    %389 = vmatprep.subr.bf16.mxu0 0
    %390 = vmatpush1.bf16.msra.mxu0 0
    %391 = vmatprep.subr.bf16.mxu0 0
    %392 = vmatpush1.bf16.msra.mxu0 0
    %393 = vmatprep.subr.bf16.mxu0 0
    %394 = vmatpush1.bf16.msra.mxu0 0
    %395 = vmatprep.subr.bf16.mxu0 0
    %396 = vmatpush1.bf16.msra.mxu0 0
    %397 = vmatprep.subr.bf16.mxu0 0
    %398 = vmatpush1.bf16.msra.mxu0 0
    %399 = vmatprep.subr.bf16.mxu0 0
    %400 = vmatpush1.bf16.msra.mxu0 0
    %401 = vmatprep.subr.bf16.mxu0 0
    %402 = vmatpush1.bf16.msra.mxu0 0
    %403 = vmatprep.subr.bf16.mxu0 0
    %404 = vmatpush1.bf16.msra.mxu0 0
    %405 = vmatprep.mubr.bf16.mxu0 0
    %406 = vmatmul.mubr.bf16.gmra.mrb[0].mxu0 %v95
    %v407 = vpop.f32.mrb[0].mxu0
    %v408 = vadd.f32 0.0, %v407
    %v409 = vpop.f32.mrb[0].mxu0
    %v410 = vpop.f32.mrb[0].mxu0
    %v411 = vadd.f32 0.0, %v410
    %v412 = vpop.f32.mrb[0].mxu0
    %413 = vmatprep.mubr.bf16.mxu0 0
    %414 = vmatmul.mubr.bf16.gmra.mrb[0].mxu0 %v98
    %v415 = vpop.f32.mrb[0].mxu0
    %v416 = vadd.f32 0.0, %v415
    %v417 = vpop.f32.mrb[0].mxu0
    %v418 = vpop.f32.mrb[0].mxu0
    %v419 = vadd.f32 0.0, %v418
    %v420 = vpop.f32.mrb[0].mxu0
    %421 = vmatprep.mubr.bf16.mxu0 0
    %422 = vmatmul.mubr.bf16.gmra.mrb[0].mxu0 %v101
    %v423 = vpop.f32.mrb[0].mxu0
    %v424 = vadd.f32 0.0, %v423
    %v425 = vpop.f32.mrb[0].mxu0
    %v426 = vpop.f32.mrb[0].mxu0
    %v427 = vadd.f32 0.0, %v426
    %v428 = vpop.f32.mrb[0].mxu0
    %429 = vdwg.mxu0
    %v430 = vpack.c.bf16 %v411, %v408
    %v431 = vpack.c.bf16 %v419, %v416
    %v432 = vpack.c.bf16 %v427, %v424
    %v434 = vlaneseq
    %v435 = vshrl.u32 %v434, 7
    %v436 = vsub.s32 0, %v435
    %v437 = vrot.slane %v369, %v436
    %v438 = vlaneseq
    %v439 = vshrl.u32 %v438, 7
    %v440 = vsub.s32 1, %v439
    %v441 = vrot.slane %v369, %v440
    %v460 = vunpack.c.l.b16 %v353
    %v461 = vunpack.c.h.b16 %v353
    %v462 = vunpack.c.l.b16 %v354
    %v463 = vunpack.c.h.b16 %v354
    %v464 = vunpack.c.l.b16 %v355
    %v465 = vunpack.c.h.b16 %v355
    %v466 = vunpack.c.l.b16 %v356
    %v467 = vunpack.c.h.b16 %v356
    %v468 = vunpack.c.l.b16 %v357
    %v469 = vunpack.c.h.b16 %v357
    %v470 = vunpack.c.l.b16 %v358
    %v471 = vunpack.c.h.b16 %v358
    %v472 = vunpack.c.l.b16 %v359
    %v473 = vunpack.c.h.b16 %v359
    %v474 = vunpack.c.l.b16 %v360
    %v475 = vunpack.c.h.b16 %v360
    %v476 = vunpack.c.l.b16 %v361
    %v477 = vunpack.c.h.b16 %v361
    %v478 = vunpack.c.l.b16 %v362
    %v479 = vunpack.c.h.b16 %v362
    %v480 = vunpack.c.l.b16 %v363
    %v481 = vunpack.c.h.b16 %v363
    %v482 = vunpack.c.l.b16 %v364
    %v483 = vunpack.c.h.b16 %v364
    %v484 = vunpack.c.l.b16 %v365
    %v485 = vunpack.c.h.b16 %v365
    %v486 = vunpack.c.l.b16 %v366
    %v487 = vunpack.c.h.b16 %v366
    %v488 = vunpack.c.l.b16 %v367
    %v489 = vunpack.c.h.b16 %v367
    %v490 = vunpack.c.l.b16 %v368
    %v491 = vunpack.c.h.b16 %v368
    %v492 = vpack.c.b16 %v462, %v460
    %v493 = vpack.c.b16 %v463, %v461
    %v494 = vpack.c.b16 %v466, %v464
    %v495 = vpack.c.b16 %v467, %v465
    %v496 = vpack.c.b16 %v470, %v468
    %v497 = vpack.c.b16 %v471, %v469
    %v498 = vpack.c.b16 %v474, %v472
    %v499 = vpack.c.b16 %v475, %v473
    %v500 = vpack.c.b16 %v478, %v476
    %v501 = vpack.c.b16 %v479, %v477
    %v502 = vpack.c.b16 %v482, %v480
    %v503 = vpack.c.b16 %v483, %v481
    %v504 = vpack.c.b16 %v486, %v484
    %v505 = vpack.c.b16 %v487, %v485
    %v506 = vpack.c.b16 %v490, %v488
    %v507 = vpack.c.b16 %v491, %v489
    %524 = vmatprep.subr.bf16.mxu0 %v493
    %525 = vmatpush1.bf16.msra.mxu0 %v492
    %526 = vmatprep.subr.bf16.mxu0 %v495
    %527 = vmatpush1.bf16.msra.mxu0 %v494
    %528 = vmatprep.subr.bf16.mxu0 %v497
    %529 = vmatpush1.bf16.msra.mxu0 %v496
    %530 = vmatprep.subr.bf16.mxu0 %v499
    %531 = vmatpush1.bf16.msra.mxu0 %v498
    %532 = vmatprep.subr.bf16.mxu0 %v501
    %533 = vmatpush1.bf16.msra.mxu0 %v500
    %534 = vmatprep.subr.bf16.mxu0 %v503
    %535 = vmatpush1.bf16.msra.mxu0 %v502
    %536 = vmatprep.subr.bf16.mxu0 %v505
    %537 = vmatpush1.bf16.msra.mxu0 %v504
    %538 = vmatprep.subr.bf16.mxu0 %v507
    %539 = vmatpush1.bf16.msra.mxu0 %v506
    %540 = vmatprep.subr.bf16.mxu0 0
    %541 = vmatpush1.bf16.msra.mxu0 0
    %542 = vmatprep.subr.bf16.mxu0 0
    %543 = vmatpush1.bf16.msra.mxu0 0
    %544 = vmatprep.subr.bf16.mxu0 0
    %545 = vmatpush1.bf16.msra.mxu0 0
    %546 = vmatprep.subr.bf16.mxu0 0
    %547 = vmatpush1.bf16.msra.mxu0 0
    %548 = vmatprep.subr.bf16.mxu0 0
    %549 = vmatpush1.bf16.msra.mxu0 0
    %550 = vmatprep.subr.bf16.mxu0 0
    %551 = vmatpush1.bf16.msra.mxu0 0
    %552 = vmatprep.subr.bf16.mxu0 0
    %553 = vmatpush1.bf16.msra.mxu0 0
    %554 = vmatprep.subr.bf16.mxu0 0
    %555 = vmatpush1.bf16.msra.mxu0 0
    %556 = vmatprep.mubr.bf16.mxu0 0
    %557 = vmatmul.mubr.bf16.gmra.mrb[0].mxu0 %v430
    %v558 = vpop.f32.mrb[0].mxu0
    %v559 = vadd.f32 %v437, %v558
    %v560 = vpop.f32.mrb[0].mxu0
    %v561 = vadd.f32 %v441, %v560
    %v562 = vpop.f32.mrb[0].mxu0
    %v563 = vadd.f32 %v437, %v562
    %v564 = vpop.f32.mrb[0].mxu0
    %v565 = vadd.f32 %v441, %v564
    %566 = vmatprep.mubr.bf16.mxu0 0
    %567 = vmatmul.mubr.bf16.gmra.mrb[0].mxu0 %v431
    %v568 = vpop.f32.mrb[0].mxu0
    %v569 = vadd.f32 %v437, %v568
    %v570 = vpop.f32.mrb[0].mxu0
    %v571 = vadd.f32 %v441, %v570
    %v572 = vpop.f32.mrb[0].mxu0
    %v573 = vadd.f32 %v437, %v572
    %v574 = vpop.f32.mrb[0].mxu0
    %v575 = vadd.f32 %v441, %v574
    %576 = vmatprep.mubr.bf16.mxu0 0
    %577 = vmatmul.mubr.bf16.gmra.mrb[0].mxu0 %v432
    %v578 = vpop.f32.mrb[0].mxu0
    %v579 = vadd.f32 %v437, %v578
    %v580 = vpop.f32.mrb[0].mxu0
    %v581 = vadd.f32 %v441, %v580
    %v582 = vpop.f32.mrb[0].mxu0
    %v583 = vadd.f32 %v437, %v582
    %v584 = vpop.f32.mrb[0].mxu0
    %v585 = vadd.f32 %v441, %v584
    %586 = vdwg.mxu0
    %v587 = vsub.f32 0.0, %v561
    %v588 = vsub.f32 0.0, %v565
    %v589 = vsub.f32 0.0, %v571
    %v590 = vsub.f32 0.0, %v575
    %v591 = vsub.f32 0.0, %v581
    %v592 = vsub.f32 0.0, %v585
    %v593 = vmul.f32 %v587, 1.442695
    %v594 = vpow.pop %v593
    %v595 = vmul.f32 %v588, 1.442695
    %v596 = vpow.pop %v595
    %v597 = vmul.f32 %v589, 1.442695
    %v598 = vpow.pop %v597
    %v599 = vmul.f32 %v590, 1.442695
    %v600 = vpow.pop %v599
    %v601 = vmul.f32 %v591, 1.442695
    %v602 = vpow.pop %v601
    %v603 = vmul.f32 %v592, 1.442695
    %v604 = vpow.pop %v603
    %v605 = vadd.f32 %v594, 1.0
    %v606 = vadd.f32 %v596, 1.0
    %v607 = vadd.f32 %v598, 1.0
    %v608 = vadd.f32 %v600, 1.0
    %v609 = vadd.f32 %v602, 1.0
    %v610 = vadd.f32 %v604, 1.0
    %v611 = vrcp.pop %v605
    %v612 = vrcp.pop %v606
    %v613 = vrcp.pop %v607
    %v614 = vrcp.pop %v608
    %v615 = vrcp.pop %v609
    %v616 = vrcp.pop %v610
    %v617 = vmul.f32 %v559, %v611
    %v618 = vmul.f32 %v563, %v612
    %v619 = vmul.f32 %v569, %v613
    %v620 = vmul.f32 %v573, %v614
    %v621 = vmul.f32 %v579, %v615
    %v622 = vmul.f32 %v583, %v616
    %v623 = vmax.f32 %v349, %v619
    %v624 = vmax.f32 %v350, %v620
    %v625 = vld [vmem:[#allocation4] sm:$0xff]
    %v626 = vld [vmem:[#allocation4 + $0x8] sm:$0xff]
    %v627 = vld [vmem:[#allocation4 + $0x10] sm:$0xff]
    %v628 = vld [vmem:[#allocation4 + $0x18] sm:$0xff]
    %v629 = vld [vmem:[#allocation4 + $0x20] sm:$0xff]
    %v630 = vld [vmem:[#allocation4 + $0x28] sm:$0xff]
    %v631 = vld [vmem:[#allocation4 + $0x30] sm:$0xff]
    %v632 = vld [vmem:[#allocation4 + $0x38] sm:$0xff]
    %v633 = vld [vmem:[#allocation4 + $0x40] sm:$0xff]
    %v634 = vld [vmem:[#allocation4 + $0x48] sm:$0xff]
    %v635 = vld [vmem:[#allocation4 + $0x50] sm:$0xff]
    %v636 = vld [vmem:[#allocation4 + $0x58] sm:$0xff]
    %v637 = vld [vmem:[#allocation4 + $0x60] sm:$0xff]
    %v638 = vld [vmem:[#allocation4 + $0x68] sm:$0xff]
    %v639 = vld [vmem:[#allocation4 + $0x70] sm:$0xff]
    %v640 = vld [vmem:[#allocation4 + $0x78] sm:$0xff]
    %v641 = vld [vmem:[%s7] sm:$0x3]
    %v642 = vpack.c.bf16 %v618, %v617
    %v643 = vpack.c.bf16 %v620, %v619
    %v644 = vpack.c.bf16 %v622, %v621
    %645 = vmatprep.subr.bf16.mxu0 0
    %646 = vmatpush1.bf16.msra.mxu0 %v642
    %647 = vmatprep.subr.bf16.mxu0 0
    %648 = vmatpush1.bf16.msra.mxu0 %v643
    %649 = vmatprep.subr.bf16.mxu0 0
    %650 = vmatpush1.bf16.msra.mxu0 %v644
    %651 = vmatprep.subr.bf16.mxu0 0
    %652 = vmatpush1.bf16.msra.mxu0 0
    %653 = vmatprep.subr.bf16.mxu0 0
    %654 = vmatpush1.bf16.msra.mxu0 0
    %655 = vmatprep.subr.bf16.mxu0 0
    %656 = vmatpush1.bf16.msra.mxu0 0
    %657 = vmatprep.subr.bf16.mxu0 0
    %658 = vmatpush1.bf16.msra.mxu0 0
    %659 = vmatprep.subr.bf16.mxu0 0
    %660 = vmatpush1.bf16.msra.mxu0 0
    %661 = vmatprep.subr.bf16.mxu0 0
    %662 = vmatpush1.bf16.msra.mxu0 0
    %663 = vmatprep.subr.bf16.mxu0 0
    %664 = vmatpush1.bf16.msra.mxu0 0
    %665 = vmatprep.subr.bf16.mxu0 0
    %666 = vmatpush1.bf16.msra.mxu0 0
    %667 = vmatprep.subr.bf16.mxu0 0
    %668 = vmatpush1.bf16.msra.mxu0 0
    %669 = vmatprep.subr.bf16.mxu0 0
    %670 = vmatpush1.bf16.msra.mxu0 0
    %671 = vmatprep.subr.bf16.mxu0 0
    %672 = vmatpush1.bf16.msra.mxu0 0
    %673 = vmatprep.subr.bf16.mxu0 0
    %674 = vmatpush1.bf16.msra.mxu0 0
    %675 = vmatprep.subr.bf16.mxu0 0
    %676 = vmatpush1.bf16.msra.mxu0 0
    %677 = vmatprep.mubr.bf16.mxu0 0
    %678 = vmatmul.mubr.bf16.gmra.mrb[0].mxu0 %v98
    %v679 = vpop.f32.mrb[0].mxu0
    %v680 = vadd.f32 0.0, %v679
    %v681 = vpop.f32.mrb[0].mxu0
    %v682 = vpop.f32.mrb[0].mxu0
    %v683 = vadd.f32 0.0, %v682
    %v684 = vpop.f32.mrb[0].mxu0
    %685 = vdwg.mxu0
    %v686 = vpack.c.bf16 %v683, %v680
    %v688 = vlaneseq
    %v689 = vshrl.u32 %v688, 7
    %v690 = vsub.s32 0, %v689
    %v691 = vrot.slane %v641, %v690
    %v692 = vlaneseq
    %v693 = vshrl.u32 %v692, 7
    %v694 = vsub.s32 1, %v693
    %v695 = vrot.slane %v641, %v694
    %v714 = vunpack.c.l.b16 %v625
    %v715 = vunpack.c.h.b16 %v625
    %v716 = vunpack.c.l.b16 %v626
    %v717 = vunpack.c.h.b16 %v626
    %v718 = vunpack.c.l.b16 %v627
    %v719 = vunpack.c.h.b16 %v627
    %v720 = vunpack.c.l.b16 %v628
    %v721 = vunpack.c.h.b16 %v628
    %v722 = vunpack.c.l.b16 %v629
    %v723 = vunpack.c.h.b16 %v629
    %v724 = vunpack.c.l.b16 %v630
    %v725 = vunpack.c.h.b16 %v630
    %v726 = vunpack.c.l.b16 %v631
    %v727 = vunpack.c.h.b16 %v631
    %v728 = vunpack.c.l.b16 %v632
    %v729 = vunpack.c.h.b16 %v632
    %v730 = vunpack.c.l.b16 %v633
    %v731 = vunpack.c.h.b16 %v633
    %v732 = vunpack.c.l.b16 %v634
    %v733 = vunpack.c.h.b16 %v634
    %v734 = vunpack.c.l.b16 %v635
    %v735 = vunpack.c.h.b16 %v635
    %v736 = vunpack.c.l.b16 %v636
    %v737 = vunpack.c.h.b16 %v636
    %v738 = vunpack.c.l.b16 %v637
    %v739 = vunpack.c.h.b16 %v637
    %v740 = vunpack.c.l.b16 %v638
    %v741 = vunpack.c.h.b16 %v638
    %v742 = vunpack.c.l.b16 %v639
    %v743 = vunpack.c.h.b16 %v639
    %v744 = vunpack.c.l.b16 %v640
    %v745 = vunpack.c.h.b16 %v640
    %v746 = vpack.c.b16 %v716, %v714
    %v747 = vpack.c.b16 %v717, %v715
    %v748 = vpack.c.b16 %v720, %v718
    %v749 = vpack.c.b16 %v721, %v719
    %v750 = vpack.c.b16 %v724, %v722
    %v751 = vpack.c.b16 %v725, %v723
    %v752 = vpack.c.b16 %v728, %v726
    %v753 = vpack.c.b16 %v729, %v727
    %v754 = vpack.c.b16 %v732, %v730
    %v755 = vpack.c.b16 %v733, %v731
    %v756 = vpack.c.b16 %v736, %v734
    %v757 = vpack.c.b16 %v737, %v735
    %v758 = vpack.c.b16 %v740, %v738
    %v759 = vpack.c.b16 %v741, %v739
    %v760 = vpack.c.b16 %v744, %v742
    %v761 = vpack.c.b16 %v745, %v743
    %778 = vmatprep.subr.bf16.mxu0 %v747
    %779 = vmatpush1.bf16.msra.mxu0 %v746
    %780 = vmatprep.subr.bf16.mxu0 %v749
    %781 = vmatpush1.bf16.msra.mxu0 %v748
    %782 = vmatprep.subr.bf16.mxu0 %v751
    %783 = vmatpush1.bf16.msra.mxu0 %v750
    %784 = vmatprep.subr.bf16.mxu0 %v753
    %785 = vmatpush1.bf16.msra.mxu0 %v752
    %786 = vmatprep.subr.bf16.mxu0 %v755
    %787 = vmatpush1.bf16.msra.mxu0 %v754
    %788 = vmatprep.subr.bf16.mxu0 %v757
    %789 = vmatpush1.bf16.msra.mxu0 %v756
    %790 = vmatprep.subr.bf16.mxu0 %v759
    %791 = vmatpush1.bf16.msra.mxu0 %v758
    %792 = vmatprep.subr.bf16.mxu0 %v761
    %793 = vmatpush1.bf16.msra.mxu0 %v760
    %794 = vmatprep.subr.bf16.mxu0 0
    %795 = vmatpush1.bf16.msra.mxu0 0
    %796 = vmatprep.subr.bf16.mxu0 0
    %797 = vmatpush1.bf16.msra.mxu0 0
    %798 = vmatprep.subr.bf16.mxu0 0
    %799 = vmatpush1.bf16.msra.mxu0 0
    %800 = vmatprep.subr.bf16.mxu0 0
    %801 = vmatpush1.bf16.msra.mxu0 0
    %802 = vmatprep.subr.bf16.mxu0 0
    %803 = vmatpush1.bf16.msra.mxu0 0
    %804 = vmatprep.subr.bf16.mxu0 0
    %805 = vmatpush1.bf16.msra.mxu0 0
    %806 = vmatprep.subr.bf16.mxu0 0
    %807 = vmatpush1.bf16.msra.mxu0 0
    %808 = vmatprep.subr.bf16.mxu0 0
    %809 = vmatpush1.bf16.msra.mxu0 0
    %810 = vmatprep.mubr.bf16.mxu0 0
    %811 = vmatmul.mubr.bf16.gmra.mrb[0].mxu0 %v686
    %v812 = vpop.f32.mrb[0].mxu0
    %v813 = vadd.f32 %v691, %v812
    %v814 = vpop.f32.mrb[0].mxu0
    %v815 = vadd.f32 %v695, %v814
    %v816 = vpop.f32.mrb[0].mxu0
    %v817 = vadd.f32 %v691, %v816
    %v818 = vpop.f32.mrb[0].mxu0
    %v819 = vadd.f32 %v695, %v818
    %820 = vdwg.mxu0
    %v821 = vsub.f32 0.0, %v815
    %v822 = vsub.f32 0.0, %v819
    %v823 = vmul.f32 %v821, 1.442695
    %v824 = vpow.pop %v823
    %v825 = vmul.f32 %v822, 1.442695
    %v826 = vpow.pop %v825
    %v827 = vadd.f32 %v824, 1.0
    %v828 = vadd.f32 %v826, 1.0
    %v829 = vrcp.pop %v827
    %v830 = vrcp.pop %v828
    %v831 = vmul.f32 %v813, %v829
    %v832 = vmul.f32 %v817, %v830
    %v833 = vmax.f32 %v623, %v831
    %v834 = vmax.f32 %v624, %v832
    %835 = vst [vmem:[%s8] sm:$0xff] %v833
    %836 = vst [vmem:[%s8 + $0x8] sm:$0xff] %v834
    // Predicated region
    $region42: #{stsgcm_forward.1} parent=1 // pred_check
      _
    $region43: #{stsgcm_forward.1} parent=1 // pred_check_branch
      %838 = sbr.rel (0) target = $region45
    $region44: #{stsgcm_forward.1} parent=1 // pred_region
      _
    $region45: #{stsgcm_forward.1} parent=1 // pred_fallthru
      _
    // Predicated region
    $region46: #{stsgcm_forward.1} parent=1 // pred_check
      _
    $region47: #{stsgcm_forward.1} parent=1 // pred_check_branch
      %840 = sbr.rel (0) target = $region49
    $region48: #{stsgcm_forward.1} parent=1 // pred_region
      _
    $region49: #{stsgcm_forward.1} parent=1 // pred_fallthru
      _
    %841 = vsyncpa [#allocation3], 1
    %842 = vsyncpa [#allocation5], 1

</llo_original>
